<compile_context>
chip_gen: v5e
topology: v5e:2x2
jax: 0.10.0
libtpu: 0.0.40
codegen_flags: <defaults>
</compile_context>

<pallas_src>
import jax
import jax.numpy as jnp
from jax.experimental import pallas as pl
from jax.experimental.pallas import tpu as pltpu

LN_EPS = 1e-5  # torch.nn.LayerNorm default eps


def _round_up(x, m):
    return ((x + m - 1) // m) * m


def _pad_last(v, k_pad):
    """Zero-pad the last (feature) dim of v up to k_pad."""
    k = v.shape[-1]
    if k == k_pad:
        return v
    pad = [(0, 0)] * (v.ndim - 1) + [(0, k_pad - k)]
    return jnp.pad(v, pad)


def _device_vmem_config():
    """(budget_bytes, vmem_limit_bytes or None) tuned per TPU generation."""
    try:
        kind = jax.devices()[0].device_kind.lower()
    except Exception:  # pragma: no cover - be robust on exotic runtimes
        kind = ""
    if "v7" in kind:
        # 64 MiB physical VMEM, 2 TensorCores: moderate budget, explicit limit.
        return 24 << 20, 48 << 20
    if "v6" in kind:
        # 128 MiB physical VMEM, 32 MiB scoped default: raise both.
        return 40 << 20, 64 << 20
    # v5e / unknown: stay under the 16 MiB scoped default, no override needed.
    return 12 << 20, None


def _choose_b_tile(b, t, k0, k_pad, budget_bytes):
    """Largest number of whole batch elements per grid step whose estimated
    VMEM footprint fits the budget, while keeping >= 2 grid steps so the
    'parallel' grid axis can be sharded across TensorCores (v7x megacore)."""
    t_pad = _round_up(max(t, 1), 8)
    best = 1
    for cand in range(1, b + 1):
        if b % cand:
            continue
        if b >= 2 and b // cand < 2:
            break  # would leave a TensorCore idle on multi-core chips
        rows = cand * t
        est = 4 * (
            2 * rows * k0            # x slab (double-buffered)
            + 2 * rows * k_pad       # output slab (double-buffered)
            + max(k0, 8) * k_pad     # weight            (Buffered(1))
            + 8 * k_pad              # packed vectors    (Buffered(1))
            + t_pad * k_pad          # positional embed  (Buffered(1))
            + 4 * rows * k_pad       # in-kernel f32 intermediates (h, hc, ...)
        )
        if est <= budget_bytes:
            best = cand
    return best


def tprep_forward(x, params):
    """x: (b, t, k0) float32.  Returns (CLS (b,1,k), token_embedding (b,t,k), pe (t,k))."""
    b, t, k0 = x.shape
    k = params["w_emb"].shape[1]
    k_pad = _round_up(k, 128)          # lane-dense compute / store width
    inv_k = 1.0 / k                    # LN statistics divide by the TRUE k

    budget, vmem_limit = _device_vmem_config()
    b_tile = _choose_b_tile(b, t, k0, k_pad, budget)
    rows = b_tile * t
    grid = (b // b_tile,)

    x = x.astype(jnp.float32)
    w = _pad_last(params["w_emb"].astype(jnp.float32), k_pad)        # (k0, k_pad)
    pe = _pad_last(params["pe_weight"].astype(jnp.float32), k_pad)   # (t,  k_pad)
    zero = jnp.zeros((k_pad,), jnp.float32)
    # One packed 8-sublane tile: [b_emb, g1, be1, g2, be2, 0, 0, 0]
    vecs = jnp.stack(
        [_pad_last(params["b_emb"].astype(jnp.float32), k_pad),
         _pad_last(params["ln1_gamma"].astype(jnp.float32), k_pad),
         _pad_last(params["ln1_beta"].astype(jnp.float32), k_pad),
         _pad_last(params["ln2_gamma"].astype(jnp.float32), k_pad),
         _pad_last(params["ln2_beta"].astype(jnp.float32), k_pad),
         zero, zero, zero],
        axis=0)                                                      # (8, k_pad)

    def kernel(x_ref, w_ref, vec_ref, pe_ref, out_ref):
        # x_ref : (b_tile, t, k0)   slab of whole batch elements
        # w_ref : (k0, k_pad)       grid-invariant, single-buffered
        # vec_ref: (8, k_pad)       packed per-feature vectors (invariant)
        # pe_ref: (t, k_pad)        positional embedding (invariant)
        xm = x_ref[...].reshape(rows, k0)
        wm = w_ref[...]
        b_emb = vec_ref[0:1, :]
        g1, be1 = vec_ref[1:2, :], vec_ref[2:3, :]
        g2, be2 = vec_ref[3:4, :], vec_ref[4:5, :]

        # Masked mean column: 1.0 on real features, 0.0 on padded lanes. The
        # row reductions then run on the (otherwise idle, K=k0) MXU instead
        # of the XLU, and padded lanes never enter the statistics.
        feat = jax.lax.broadcasted_iota(jnp.int32, (k_pad, 1), 0)
        ones_col = (feat < k).astype(jnp.float32)

        def layernorm(h, gamma, beta):
            # centered two-pass variance (matches torch.nn.LayerNorm numerics)
            mu = jnp.dot(h, ones_col, preferred_element_type=jnp.float32) * inv_k
            hc = h - mu
            var = jnp.dot(hc * hc, ones_col,
                          preferred_element_type=jnp.float32) * inv_k
            return hc * jax.lax.rsqrt(var + LN_EPS) * gamma + beta

        # Linear(k0 -> k) over the whole slab (M = b_tile*t rows per MXU call)
        h = jnp.dot(xm, wm, preferred_element_type=jnp.float32) + b_emb
        h = layernorm(h, g1, be1)                      # embed_tokens LayerNorm
        # broadcast-add the positional embedding over the batch sub-dim
        h = (h.reshape(b_tile, t, k_pad) + pe_ref[...][None, :, :]
             ).reshape(rows, k_pad)
        h = layernorm(h, g2, be2)                      # self.layer_norm
        out_ref[...] = h.reshape(b_tile, t, k_pad).astype(out_ref.dtype)

    single = pl.Buffered(1)  # grid-invariant inputs: one VMEM buffer, one DMA
    cost = pl.CostEstimate(
        flops=2 * b * t * k0 * k_pad + 8 * b * t * k_pad,
        transcendentals=2 * b * t,
        bytes_accessed=4 * (b * t * k0 + k0 * k_pad + 8 * k_pad
                            + t * k_pad + b * t * k_pad),
    )
    cp_kwargs = dict(dimension_semantics=("parallel",))
    if vmem_limit is not None:
        cp_kwargs["vmem_limit_bytes"] = int(vmem_limit)

    out_pad = pl.pallas_call(
        kernel,
        out_shape=jax.ShapeDtypeStruct((b, t, k_pad), jnp.float32),
        grid_spec=pltpu.PrefetchScalarGridSpec(
            num_scalar_prefetch=0,
            grid=grid,
            in_specs=[
                pl.BlockSpec((b_tile, t, k0), lambda i: (i, 0, 0)),
                pl.BlockSpec((k0, k_pad), lambda i: (0, 0), pipeline_mode=single),
                pl.BlockSpec((8, k_pad), lambda i: (0, 0), pipeline_mode=single),
                pl.BlockSpec((t, k_pad), lambda i: (0, 0), pipeline_mode=single),
            ],
            out_specs=pl.BlockSpec((b_tile, t, k_pad), lambda i: (i, 0, 0)),
        ),
        compiler_params=pltpu.CompilerParams(**cp_kwargs),
        cost_estimate=cost,
    )(x, w, vecs, pe)

    tok_emb = out_pad if k_pad == k else out_pad[:, :, :k]

    # CLS = nn.Linear(1, k, bias=False)([1.0]) == cls_weight[:, 0]; broadcast.
    cls_vec = params["cls_weight"][:, 0]                        # (k,)
    CLS = jnp.broadcast_to(cls_vec[None, None, :], (b, 1, k))   # (b, 1, k)

    return CLS, tok_emb, params["pe_weight"]


# ----------------------------- reference -----------------------------------
def _layernorm_ref(h, gamma, beta):
    mu = jnp.mean(h, axis=-1, keepdims=True)
    var = jnp.mean((h - mu) * (h - mu), axis=-1, keepdims=True)
    return (h - mu) * jax.lax.rsqrt(var + LN_EPS) * gamma + beta


def _reference(x, params):
    """Pure-JAX reference mirroring the PyTorch forward."""
    k = params["w_emb"].shape[1]
    h = x @ params["w_emb"] + params["b_emb"]
    h = _layernorm_ref(h, params["ln1_gamma"], params["ln1_beta"])
    h = h + params["pe_weight"][None, :, :]
    h = _layernorm_ref(h, params["ln2_gamma"], params["ln2_beta"])
    cls_vec = params["cls_weight"][:, 0]
    CLS = jnp.broadcast_to(cls_vec[None, None, :], (x.shape[0], 1, k))
    return CLS, h, params["pe_weight"]


if __name__ == "__main__":
    # Small shapes consistent with (b, t, k0) input: batch=2, seq=8, k0=4, k=32
    b, t, k0, k = 2, 8, 4, 32

    key = jax.random.PRNGKey(0)
    kx, kw, kb, kp, kc, kg1, kb1, kg2, kb2 = jax.random.split(key, 9)

    x = jax.random.normal(kx, (b, t, k0), dtype=jnp.float32)

    params = {
        "w_emb": 0.1 * jax.random.normal(kw, (k0, k), dtype=jnp.float32),
        "b_emb": 0.1 * jax.random.normal(kb, (k,), dtype=jnp.float32),
        "ln1_gamma": 1.0 + 0.05 * jax.random.normal(kg1, (k,), dtype=jnp.float32),
        "ln1_beta": 0.05 * jax.random.normal(kb1, (k,), dtype=jnp.float32),
        "pe_weight": 0.1 * jax.random.normal(kp, (t, k), dtype=jnp.float32),
        "ln2_gamma": 1.0 + 0.05 * jax.random.normal(kg2, (k,), dtype=jnp.float32),
        "ln2_beta": 0.05 * jax.random.normal(kb2, (k,), dtype=jnp.float32),
        "cls_weight": 0.1 * jax.random.normal(kc, (k, 1), dtype=jnp.float32),
    }

    CLS, tok_emb, pe_out = tprep_forward(x, params)
    jax.block_until_ready((CLS, tok_emb, pe_out))

    # sanity check against pure-JAX reference
    CLS_r, tok_r, pe_r = _reference(x, params)
    assert jnp.allclose(CLS, CLS_r, atol=1e-5)
    assert jnp.allclose(tok_emb, tok_r, atol=1e-5)
    assert jnp.allclose(pe_out, pe_r)

    print("KERNEL_OK")
</pallas_src>

<mosaic_0001>
module attributes {stable_mosaic.version = 11 : i64} {
  func.func @kernel(%arg0: i32, %arg1: memref<1x8x4xf32, #tpu.memory_space<vmem>>, %arg2: memref<4x128xf32, #tpu.memory_space<vmem>>, %arg3: memref<8x128xf32, #tpu.memory_space<vmem>>, %arg4: memref<8x128xf32, #tpu.memory_space<vmem>>, %arg5: memref<1x8x128xf32, #tpu.memory_space<vmem>>) attributes {dimension_semantics = [#tpu.dimension_semantics<parallel>], iteration_bounds = array<i64: 2>, scalar_prefetch = 0 : i64, scratch_operands = 0 : i64, tpu.core_type = #tpu.core_type<tc>, window_params = [{transform_indices = @transform_0, window_bounds = array<i64: 1, 8, 4>}, {pipeline_mode = #tpu.pipeline_mode<synchronous>, transform_indices = @transform_1, window_bounds = array<i64: 4, 128>}, {pipeline_mode = #tpu.pipeline_mode<synchronous>, transform_indices = @transform_2, window_bounds = array<i64: 8, 128>}, {pipeline_mode = #tpu.pipeline_mode<synchronous>, transform_indices = @transform_3, window_bounds = array<i64: 8, 128>}, {transform_indices = @transform_4, window_bounds = array<i64: 1, 8, 128>}]} {
    %c0 = arith.constant 0 : index
    %c0_0 = arith.constant 0 : index
    %c0_1 = arith.constant 0 : index
    %0 = vector.load %arg1[%c0, %c0_0, %c0_1] : memref<1x8x4xf32, #tpu.memory_space<vmem>>, vector<1x8x4xf32>
    %1 = vector.shape_cast %0 : vector<1x8x4xf32> to vector<8x4xf32>
    %c0_2 = arith.constant 0 : index
    %c0_3 = arith.constant 0 : index
    %2 = vector.load %arg2[%c0_2, %c0_3] : memref<4x128xf32, #tpu.memory_space<vmem>>, vector<4x128xf32>
    %c0_4 = arith.constant 0 : index
    %c0_5 = arith.constant 0 : index
    %3 = vector.load %arg3[%c0_4, %c0_5] : memref<8x128xf32, #tpu.memory_space<vmem>>, vector<1x128xf32>
    %c1 = arith.constant 1 : index
    %c0_6 = arith.constant 0 : index
    %4 = vector.load %arg3[%c1, %c0_6] : memref<8x128xf32, #tpu.memory_space<vmem>>, vector<1x128xf32>
    %c2 = arith.constant 2 : index
    %c0_7 = arith.constant 0 : index
    %5 = vector.load %arg3[%c2, %c0_7] : memref<8x128xf32, #tpu.memory_space<vmem>>, vector<1x128xf32>
    %c3 = arith.constant 3 : index
    %c0_8 = arith.constant 0 : index
    %6 = vector.load %arg3[%c3, %c0_8] : memref<8x128xf32, #tpu.memory_space<vmem>>, vector<1x128xf32>
    %c4 = arith.constant 4 : index
    %c0_9 = arith.constant 0 : index
    %7 = vector.load %arg3[%c4, %c0_9] : memref<8x128xf32, #tpu.memory_space<vmem>>, vector<1x128xf32>
    %8 = tpu.iota {dimensions = array<i32: 0>} : vector<128x1xi32>
    %c32_i32 = arith.constant 32 : i32
    %9 = vector.broadcast %c32_i32 : i32 to vector<128x1xi32>
    %10 = arith.cmpi slt, %8, %9 : vector<128x1xi32>
    %11 = arith.extui %10 : vector<128x1xi1> to vector<128x1xi32>
    %12 = arith.sitofp %11 : vector<128x1xi32> to vector<128x1xf32>
    %cst = arith.constant dense<0.000000e+00> : vector<8x128xf32>
    %13 = tpu.matmul %1, %2, %cst {dimension_numbers = #tpu.dot_dimension_numbers<[1], [0], [0], [1], [0, 0, 1, 1], [], []>} : vector<8x4xf32>, vector<4x128xf32>, vector<8x128xf32> -> vector<8x128xf32>
    %14 = vector.broadcast %3 : vector<1x128xf32> to vector<8x128xf32>
    %15 = arith.addf %13, %14 : vector<8x128xf32>
    %cst_10 = arith.constant dense<0.000000e+00> : vector<8x1xf32>
    %16 = tpu.matmul %15, %12, %cst_10 {dimension_numbers = #tpu.dot_dimension_numbers<[1], [0], [0], [1], [0, 0, 1, 1], [], []>} : vector<8x128xf32>, vector<128x1xf32>, vector<8x1xf32> -> vector<8x1xf32>
    %cst_11 = arith.constant 3.125000e-02 : f32
    %17 = vector.broadcast %cst_11 : f32 to vector<8x1xf32>
    %18 = arith.mulf %16, %17 : vector<8x1xf32>
    %19 = vector.broadcast %18 : vector<8x1xf32> to vector<8x128xf32>
    %20 = arith.subf %15, %19 : vector<8x128xf32>
    %21 = arith.mulf %20, %20 : vector<8x128xf32>
    %cst_12 = arith.constant dense<0.000000e+00> : vector<8x1xf32>
    %22 = tpu.matmul %21, %12, %cst_12 {dimension_numbers = #tpu.dot_dimension_numbers<[1], [0], [0], [1], [0, 0, 1, 1], [], []>} : vector<8x128xf32>, vector<128x1xf32>, vector<8x1xf32> -> vector<8x1xf32>
    %cst_13 = arith.constant 3.125000e-02 : f32
    %23 = vector.broadcast %cst_13 : f32 to vector<8x1xf32>
    %24 = arith.mulf %22, %23 : vector<8x1xf32>
    %cst_14 = arith.constant 9.99999974E-6 : f32
    %25 = vector.broadcast %cst_14 : f32 to vector<8x1xf32>
    %26 = arith.addf %24, %25 : vector<8x1xf32>
    %27 = math.rsqrt %26 : vector<8x1xf32>
    %28 = vector.broadcast %27 : vector<8x1xf32> to vector<8x128xf32>
    %29 = arith.mulf %20, %28 : vector<8x128xf32>
    %30 = vector.broadcast %4 : vector<1x128xf32> to vector<8x128xf32>
    %31 = arith.mulf %29, %30 : vector<8x128xf32>
    %32 = vector.broadcast %5 : vector<1x128xf32> to vector<8x128xf32>
    %33 = arith.addf %31, %32 : vector<8x128xf32>
    %34 = vector.shape_cast %33 : vector<8x128xf32> to vector<1x8x128xf32>
    %c0_15 = arith.constant 0 : index
    %c0_16 = arith.constant 0 : index
    %35 = vector.load %arg4[%c0_15, %c0_16] : memref<8x128xf32, #tpu.memory_space<vmem>>, vector<8x128xf32>
    %36 = vector.shape_cast %35 : vector<8x128xf32> to vector<1x8x128xf32>
    %37 = arith.addf %34, %36 : vector<1x8x128xf32>
    %38 = vector.shape_cast %37 : vector<1x8x128xf32> to vector<8x128xf32>
    %cst_17 = arith.constant dense<0.000000e+00> : vector<8x1xf32>
    %39 = tpu.matmul %38, %12, %cst_17 {dimension_numbers = #tpu.dot_dimension_numbers<[1], [0], [0], [1], [0, 0, 1, 1], [], []>} : vector<8x128xf32>, vector<128x1xf32>, vector<8x1xf32> -> vector<8x1xf32>
    %cst_18 = arith.constant 3.125000e-02 : f32
    %40 = vector.broadcast %cst_18 : f32 to vector<8x1xf32>
    %41 = arith.mulf %39, %40 : vector<8x1xf32>
    %42 = vector.broadcast %41 : vector<8x1xf32> to vector<8x128xf32>
    %43 = arith.subf %38, %42 : vector<8x128xf32>
    %44 = arith.mulf %43, %43 : vector<8x128xf32>
    %cst_19 = arith.constant dense<0.000000e+00> : vector<8x1xf32>
    %45 = tpu.matmul %44, %12, %cst_19 {dimension_numbers = #tpu.dot_dimension_numbers<[1], [0], [0], [1], [0, 0, 1, 1], [], []>} : vector<8x128xf32>, vector<128x1xf32>, vector<8x1xf32> -> vector<8x1xf32>
    %cst_20 = arith.constant 3.125000e-02 : f32
    %46 = vector.broadcast %cst_20 : f32 to vector<8x1xf32>
    %47 = arith.mulf %45, %46 : vector<8x1xf32>
    %cst_21 = arith.constant 9.99999974E-6 : f32
    %48 = vector.broadcast %cst_21 : f32 to vector<8x1xf32>
    %49 = arith.addf %47, %48 : vector<8x1xf32>
    %50 = math.rsqrt %49 : vector<8x1xf32>
    %51 = vector.broadcast %50 : vector<8x1xf32> to vector<8x128xf32>
    %52 = arith.mulf %43, %51 : vector<8x128xf32>
    %53 = vector.broadcast %6 : vector<1x128xf32> to vector<8x128xf32>
    %54 = arith.mulf %52, %53 : vector<8x128xf32>
    %55 = vector.broadcast %7 : vector<1x128xf32> to vector<8x128xf32>
    %56 = arith.addf %54, %55 : vector<8x128xf32>
    %57 = vector.shape_cast %56 : vector<8x128xf32> to vector<1x8x128xf32>
    %c0_22 = arith.constant 0 : index
    %c0_23 = arith.constant 0 : index
    %c0_24 = arith.constant 0 : index
    %58 = vector.load %arg5[%c0_22, %c0_23, %c0_24] : memref<1x8x128xf32, #tpu.memory_space<vmem>>, vector<1x8x128xf32>
    tpu.vector_store %arg5[%c0_22, %c0_23, %c0_24], %57 {strides = array<i32>} : memref<1x8x128xf32, #tpu.memory_space<vmem>>, vector<1x8x128xf32>,
    return
  }
  func.func @transform_0(%arg0: i32) -> (i32, i32, i32) {
    %c0_i32 = arith.constant 0 : i32
    %c0_i32_0 = arith.constant 0 : i32
    %c0_i32_1 = arith.constant 0 : i32
    return %arg0, %c0_i32, %c0_i32_0 : i32, i32, i32
  }
  func.func @transform_1(%arg0: i32) -> (i32, i32) {
    %c0_i32 = arith.constant 0 : i32
    %c0_i32_0 = arith.constant 0 : i32
    %c0_i32_1 = arith.constant 0 : i32
    return %c0_i32, %c0_i32_0 : i32, i32
  }
  func.func @transform_2(%arg0: i32) -> (i32, i32) {
    %c0_i32 = arith.constant 0 : i32
    %c0_i32_0 = arith.constant 0 : i32
    %c0_i32_1 = arith.constant 0 : i32
    return %c0_i32, %c0_i32_0 : i32, i32
  }
  func.func @transform_3(%arg0: i32) -> (i32, i32) {
    %c0_i32 = arith.constant 0 : i32
    %c0_i32_0 = arith.constant 0 : i32
    %c0_i32_1 = arith.constant 0 : i32
    return %c0_i32, %c0_i32_0 : i32, i32
  }
  func.func @transform_4(%arg0: i32) -> (i32, i32, i32) {
    %c0_i32 = arith.constant 0 : i32
    %c0_i32_0 = arith.constant 0 : i32
    %c0_i32_1 = arith.constant 0 : i32
    return %arg0, %c0_i32, %c0_i32_0 : i32, i32, i32
  }
}

</mosaic_0001>

<llo_original>
// kernel: tpu_custom_call.1
$region0: #{tpu_custom_call.1}
  #allocation0 [shape = 'u32[]', space=smem, size = 0x4, offset = 0x4, fixed_abs, tag = 'smem constant byte address 0x4 - core index']
  #allocation1 [shape = 'u32[72,128]{1,0:T(1,128)}', space=vmem, size = 0x9000, scoped, tag = 'internal scratch']
  %s0 = inlined_call_operand.vmem [shape: f32[2,8,4], index: 0, kind: input, shape index: {}]
  %s1 = inlined_call_operand.vmem [shape: f32[4,128], index: 1, kind: input, shape index: {}]
  %s2 = inlined_call_operand.vmem [shape: f32[8,128], index: 2, kind: input, shape index: {}]
  %s3 = inlined_call_operand.vmem [shape: f32[8,128], index: 3, kind: input, shape index: {}]
  %s4 = inlined_call_operand.hbm [shape: f32[2,8,128], index: 4, kind: output, shape index: {}]
  %s5 = sld [smem:[#allocation0]]
  $region49: #{tpu_custom_call.1} parent=0
    _
  %s7 = ssub.s32 1, %s5
  %s8 = scalar_select 0, %s7, %s5
  $region1: #{tpu_custom_call.1} parent=0
    #allocation2 [shape = 'u8[8192]{0}', space=vmem, size = 0x2000, scoped, tag = 'output window, operand 0']
    #allocation3 [shape = 's32[2]{0}', space=sflag, size = 0x8, scoped, tag = 'scoped memory for tpu_custom_call.1']
    %9 = vsyncpa [#allocation3], 0
    %s10 = scalar_lea.sflag [#allocation3], 1
    %11 = vsyncpa %s10, 0
    loop: start=0, step=1, limit=4
    $region2: #{tpu_custom_call.1} parent=1 // loop_pre_header
      _
    $region3: #{tpu_custom_call.1} parent=1 // loop_header
      %s13 = sphi 0, %s17
      %p14 = scmp.ge.s32.totalorder %s13, 4
      %s23 = sphi 0, %s25
      %s26 = sphi 0, %s23
      %s27 = sphi 0, %s26
      %s43 = sphi 0, %s27
      %s47 = sphi 0, %s47
      %s49 = sphi 0, %s47
      %s50 = sphi 0, %s49
      %s64 = sphi 0, %s50
      %s68 = sphi 0, %s68
      %s70 = sphi 0, %s68
      %s71 = sphi 0, %s70
      %s85 = sphi 0, %s71
      %s89 = sphi 0, %s89
      %s91 = sphi 0, %s89
      %s92 = sphi 0, %s91
      %s106 = sphi 0, %s92
      %s112 = sphi 0, %s114
      %s115 = sphi 0, %s112
      %s116 = sphi 0, %s115
      %s132 = sphi 0, %s116
    $region4: #{tpu_custom_call.1} parent=1 // loop_header_branch
      %16 = sbr.rel (%p14) target = $region8
    $region5: #{tpu_custom_call.1} parent=1 // loop_body
      %s18 = ssub.s32 %s13, 1
      %s19 = ssub.s32 %s13, 2
      %s20 = sadd.s32 %s13, 1
      %s21 = ssub.s32 %s13, %s20
      %p22 = scmp.eq.s32.totalorder %s21, 0
      %s24 = sadd.s32 %s23, 1
      %s25 = scalar_select %p22, %s23, %s24
      %p28 = pneg %p22
      %p29 = scmp.eq.s32.totalorder %s13, 1
      %p30 = por %p28, %p29
      %p31 = scmp.ne.s32.totalorder %s23, %s26
      %p32 = scmp.eq.s32.totalorder %s13, 0
      %p33 = por %p31, %p32
      %p34 = scmp.ne.s32.totalorder %s23, %s26
      %p35 = scmp.eq.s32.totalorder %s18, 1
      %p36 = por %p34, %p35
      %p37 = scmp.ne.s32.totalorder %s26, %s27
      %p38 = scmp.eq.s32.totalorder %s18, 0
      %p39 = por %p37, %p38
      %p40 = scmp.ne.s32.totalorder %s26, %s27
      %p41 = scmp.eq.s32.totalorder %s19, 1
      %p42 = por %p40, %p41
      %p44 = scmp.ne.s32.totalorder %s27, %s43
      %p45 = scmp.eq.s32.totalorder %s19, 0
      %p46 = por %p44, %p45
      %s48 = sadd.s32 %s47, 1
      %p51 = scmp.eq.s32.totalorder %s13, 1
      %p52 = scmp.ne.s32.totalorder %s47, %s49
      %p53 = scmp.eq.s32.totalorder %s13, 0
      %p54 = por %p52, %p53
      %p55 = scmp.ne.s32.totalorder %s47, %s49
      %p56 = scmp.eq.s32.totalorder %s18, 1
      %p57 = por %p55, %p56
      %p58 = scmp.ne.s32.totalorder %s49, %s50
      %p59 = scmp.eq.s32.totalorder %s18, 0
      %p60 = por %p58, %p59
      %p61 = scmp.ne.s32.totalorder %s49, %s50
      %p62 = scmp.eq.s32.totalorder %s19, 1
      %p63 = por %p61, %p62
      %p65 = scmp.ne.s32.totalorder %s50, %s64
      %p66 = scmp.eq.s32.totalorder %s19, 0
      %p67 = por %p65, %p66
      %s69 = sadd.s32 %s68, 1
      %p72 = scmp.eq.s32.totalorder %s13, 1
      %p73 = scmp.ne.s32.totalorder %s68, %s70
      %p74 = scmp.eq.s32.totalorder %s13, 0
      %p75 = por %p73, %p74
      %p76 = scmp.ne.s32.totalorder %s68, %s70
      %p77 = scmp.eq.s32.totalorder %s18, 1
      %p78 = por %p76, %p77
      %p79 = scmp.ne.s32.totalorder %s70, %s71
      %p80 = scmp.eq.s32.totalorder %s18, 0
      %p81 = por %p79, %p80
      %p82 = scmp.ne.s32.totalorder %s70, %s71
      %p83 = scmp.eq.s32.totalorder %s19, 1
      %p84 = por %p82, %p83
      %p86 = scmp.ne.s32.totalorder %s71, %s85
      %p87 = scmp.eq.s32.totalorder %s19, 0
      %p88 = por %p86, %p87
      %s90 = sadd.s32 %s89, 1
      %p93 = scmp.eq.s32.totalorder %s13, 1
      %p94 = scmp.ne.s32.totalorder %s89, %s91
      %p95 = scmp.eq.s32.totalorder %s13, 0
      %p96 = por %p94, %p95
      %p97 = scmp.ne.s32.totalorder %s89, %s91
      %p98 = scmp.eq.s32.totalorder %s18, 1
      %p99 = por %p97, %p98
      %p100 = scmp.ne.s32.totalorder %s91, %s92
      %p101 = scmp.eq.s32.totalorder %s18, 0
      %p102 = por %p100, %p101
      %p103 = scmp.ne.s32.totalorder %s91, %s92
      %p104 = scmp.eq.s32.totalorder %s19, 1
      %p105 = por %p103, %p104
      %p107 = scmp.ne.s32.totalorder %s92, %s106
      %p108 = scmp.eq.s32.totalorder %s19, 0
      %p109 = por %p107, %p108
      %s110 = ssub.s32 %s13, %s20
      %p111 = scmp.eq.s32.totalorder %s110, 0
      %s113 = sadd.s32 %s112, 1
      %s114 = scalar_select %p111, %s112, %s113
      %p117 = pneg %p111
      %p118 = scmp.eq.s32.totalorder %s13, 1
      %p119 = por %p117, %p118
      %p120 = scmp.ne.s32.totalorder %s112, %s115
      %p121 = scmp.eq.s32.totalorder %s13, 0
      %p122 = por %p120, %p121
      %p123 = scmp.ne.s32.totalorder %s112, %s115
      %p124 = scmp.eq.s32.totalorder %s18, 1
      %p125 = por %p123, %p124
      %p126 = scmp.ne.s32.totalorder %s115, %s116
      %p127 = scmp.eq.s32.totalorder %s18, 0
      %p128 = por %p126, %p127
      %p129 = scmp.ne.s32.totalorder %s115, %s116
      %p130 = scmp.eq.s32.totalorder %s19, 1
      %p131 = por %p129, %p130
      %p133 = scmp.ne.s32.totalorder %s116, %s132
      %p134 = scmp.eq.s32.totalorder %s19, 0
      %p135 = por %p133, %p134
      %p136 = scmp.le.s32.totalorder 1, %s13
      %p137 = scmp.lt.s32.totalorder %s13, 3
      %p138 = pnand %p136, %p137
      %p139 = pneg %p138
      // Predicated region
      $region9: #{tpu_custom_call.1} parent=5 // pred_check
        _
      $region10: #{tpu_custom_call.1} parent=5 // pred_check_branch
        %141 = sbr.rel (%p138) target = $region12
      $region11: #{tpu_custom_call.1} parent=5 // pred_region
        %s142 = ssub.s32 %s13, 1
        // Predicated region
        $region13: #{tpu_custom_call.1} parent=11 // pred_check
          %p143 = pneg %p60
        $region14: #{tpu_custom_call.1} parent=11 // pred_check_branch
          %145 = sbr.rel (%p143) target = $region16
        $region15: #{tpu_custom_call.1} parent=11 // pred_region
          _
        $region16: #{tpu_custom_call.1} parent=11 // pred_fallthru
          _
        // Predicated region
        $region17: #{tpu_custom_call.1} parent=11 // pred_check
          %p146 = pneg %p81
        $region18: #{tpu_custom_call.1} parent=11 // pred_check_branch
          %148 = sbr.rel (%p146) target = $region20
        $region19: #{tpu_custom_call.1} parent=11 // pred_region
          _
        $region20: #{tpu_custom_call.1} parent=11 // pred_fallthru
          _
        // Predicated region
        $region21: #{tpu_custom_call.1} parent=11 // pred_check
          %p149 = pneg %p102
        $region22: #{tpu_custom_call.1} parent=11 // pred_check_branch
          %151 = sbr.rel (%p149) target = $region24
        $region23: #{tpu_custom_call.1} parent=11 // pred_region
          _
        $region24: #{tpu_custom_call.1} parent=11 // pred_fallthru
          _
      $region12: #{tpu_custom_call.1} parent=5 // pred_fallthru
        _
      %p152 = scmp.lt.s32.totalorder %s13, 2
      // Predicated region
      $region25: #{tpu_custom_call.1} parent=5 // pred_check
        %p153 = pneg %p152
      $region26: #{tpu_custom_call.1} parent=5 // pred_check_branch
        %155 = sbr.rel (%p153) target = $region28
      $region27: #{tpu_custom_call.1} parent=5 // pred_region
        // Predicated region
        $region29: #{tpu_custom_call.1} parent=27 // pred_check
          %p156 = pneg %p33
        $region30: #{tpu_custom_call.1} parent=27 // pred_check_branch
          %158 = sbr.rel (%p156) target = $region32
        $region31: #{tpu_custom_call.1} parent=27 // pred_region
          %p159 = scmp.lt.s32.totalorder %s13, 1
          %s160 = scalar_select %p159, %s13, 1
          %s161 = smul.addr %s160, 8
          %s162 = scalar_lea.vmem %s0, %s161
        $region32: #{tpu_custom_call.1} parent=27 // pred_fallthru
          _
      $region28: #{tpu_custom_call.1} parent=5 // pred_fallthru
        _
      %p163 = scmp.le.s32.totalorder 1, %s13
      %p164 = scmp.lt.s32.totalorder %s13, 3
      %p165 = pnand %p163, %p164
      %p166 = pneg %p165
      // Predicated region
      $region33: #{tpu_custom_call.1} parent=5 // pred_check
        _
      $region34: #{tpu_custom_call.1} parent=5 // pred_check_branch
        %168 = sbr.rel (%p165) target = $region36
      $region35: #{tpu_custom_call.1} parent=5 // pred_region
        %s169 = ssub.s32 %s13, 1
        %p170 = scmp.lt.s32.totalorder %s18, 1
        %s171 = scalar_select %p170, %s18, 1
        %s172 = smul.addr %s171, 8
        %s173 = scalar_lea.vmem %s0, %s172
        %p174 = pneg %p39
        %p175 = pneg %p36
        %p176 = pneg %p60
        %p177 = pneg %p57
        %p178 = pneg %p81
        %p179 = pneg %p78
        %p180 = pneg %p102
        %p181 = pneg %p99
        %p182 = pneg %p128
        %p183 = pneg %p125
        %s184 = sand.u32 %s115, 1
        %s185 = scalar_lea.sflag [#allocation3], %s184
        %s186 = sand.u32 %s115, 1
        %s187 = smul.addr %s186, 8
        %s188 = scalar_lea.vmem [#allocation2], %s187
        %p189 = scmp.lt.s32.totalorder %s18, 1
        %s190 = scalar_select %p189, %s18, 1
        %s191 = smul.addr %s190, 8
        %s192 = scalar_lea.vmem %s0, %s191
        %v193 = vld [vmem:[%s192] sm:$0xff]
        %v194 = vld [vmem:[%s1] sm:$0xf]
        %v195 = vld [vmem:[%s2] sm:$0x1]
        %v196 = vld [vmem:[%s2 + $0x1] sm:$0x1]
        %v197 = vld [vmem:[%s2 + $0x2] sm:$0x1]
        %v198 = vld [vmem:[%s2 + $0x3] sm:$0x1]
        %v199 = vld [vmem:[%s2 + $0x4] sm:$0x1]
        %v200 = vlaneseq
        %v201 = vshrl.u32 %v200, 7
        %v202 = vadd.s32 %v201, 8
        %v203 = vadd.s32 %v201, 16
        %v204 = vadd.s32 %v201, 24
        %v205 = vadd.s32 %v201, 32
        %v206 = vadd.s32 %v201, 40
        %v207 = vadd.s32 %v201, 48
        %v208 = vadd.s32 %v201, 56
        %v209 = vadd.s32 %v201, 64
        %v210 = vadd.s32 %v201, 72
        %v211 = vadd.s32 %v201, 80
        %v212 = vadd.s32 %v201, 88
        %v213 = vadd.s32 %v201, 96
        %v214 = vadd.s32 %v201, 104
        %v215 = vadd.s32 %v201, 112
        %v216 = vadd.s32 %v201, 120
        %vm217 = vcmp.lt.s32.totalorder %v201, 32
        %vm218 = vcmp.lt.s32.totalorder %v202, 32
        %vm219 = vcmp.lt.s32.totalorder %v203, 32
        %vm220 = vcmp.lt.s32.totalorder %v204, 32
        %vm221 = vcmp.lt.s32.totalorder %v205, 32
        %vm222 = vcmp.lt.s32.totalorder %v206, 32
        %vm223 = vcmp.lt.s32.totalorder %v207, 32
        %vm224 = vcmp.lt.s32.totalorder %v208, 32
        %vm225 = vcmp.lt.s32.totalorder %v209, 32
        %vm226 = vcmp.lt.s32.totalorder %v210, 32
        %vm227 = vcmp.lt.s32.totalorder %v211, 32
        %vm228 = vcmp.lt.s32.totalorder %v212, 32
        %vm229 = vcmp.lt.s32.totalorder %v213, 32
        %vm230 = vcmp.lt.s32.totalorder %v214, 32
        %vm231 = vcmp.lt.s32.totalorder %v215, 32
        %vm232 = vcmp.lt.s32.totalorder %v216, 32
        %v233 = vsel %vm217, 1, 0
        %v234 = vsel %vm218, 1, 0
        %v235 = vsel %vm219, 1, 0
        %v236 = vsel %vm220, 1, 0
        %v237 = vsel %vm221, 1, 0
        %v238 = vsel %vm222, 1, 0
        %v239 = vsel %vm223, 1, 0
        %v240 = vsel %vm224, 1, 0
        %v241 = vsel %vm225, 1, 0
        %v242 = vsel %vm226, 1, 0
        %v243 = vsel %vm227, 1, 0
        %v244 = vsel %vm228, 1, 0
        %v245 = vsel %vm229, 1, 0
        %v246 = vsel %vm230, 1, 0
        %v247 = vsel %vm231, 1, 0
        %v248 = vsel %vm232, 1, 0
        %v249 = vcvt.s32.f32 %v233
        %v250 = vcvt.s32.f32 %v234
        %v251 = vcvt.s32.f32 %v235
        %v252 = vcvt.s32.f32 %v236
        %v253 = vcvt.s32.f32 %v237
        %v254 = vcvt.s32.f32 %v238
        %v255 = vcvt.s32.f32 %v239
        %v256 = vcvt.s32.f32 %v240
        %v257 = vcvt.s32.f32 %v241
        %v258 = vcvt.s32.f32 %v242
        %v259 = vcvt.s32.f32 %v243
        %v260 = vcvt.s32.f32 %v244
        %v261 = vcvt.s32.f32 %v245
        %v262 = vcvt.s32.f32 %v246
        %v263 = vcvt.s32.f32 %v247
        %v264 = vcvt.s32.f32 %v248
        %v265 = vperm.slane %v195, 0
        %vm266 = vcmask 31744
        %v268 = vsel %vm266, %v193, 0
        %vm270 = vcmask 1043456
        %v272 = vsel %vm270, %v194, 0
        %274 = vmatpush.msra.mxu0 0.0
        %275 = vmatpush.msra.mxu0 0.0
        %276 = vmatpush.msra.mxu0 0.0
        %277 = vmatpush.msra.mxu0 0.0
        %278 = vmatpush.msra.mxu0 0.0
        %279 = vmatpush.msra.mxu0 0.0
        %280 = vmatpush.msra.mxu0 0.0
        %281 = vmatpush.msra.mxu0 0.0
        %282 = vmatpush.msra.mxu0 0.0
        %283 = vmatpush.msra.mxu0 0.0
        %284 = vmatpush.msra.mxu0 0.0
        %285 = vmatpush.msra.mxu0 0.0
        %286 = vmatpush.msra.mxu0 0.0
        %287 = vmatpush.msra.mxu0 0.0
        %288 = vmatpush.msra.mxu0 0.0
        %289 = vmatpush.msra.mxu0 %v272
        %290 = vmatmul.f32.gmra.mxu0 %v268
        %v291 = vpop.f32.mrf.mxu0
        %v292 = vadd.f32 %v265, %v291
        %293 = vdwg.mxu0
        %294 = vmatpush.msra.mxu0 %v264
        %295 = vmatpush.msra.mxu0 %v263
        %296 = vmatpush.msra.mxu0 %v262
        %297 = vmatpush.msra.mxu0 %v261
        %298 = vmatpush.msra.mxu0 %v260
        %299 = vmatpush.msra.mxu0 %v259
        %300 = vmatpush.msra.mxu0 %v258
        %301 = vmatpush.msra.mxu0 %v257
        %302 = vmatpush.msra.mxu0 %v256
        %303 = vmatpush.msra.mxu0 %v255
        %304 = vmatpush.msra.mxu0 %v254
        %305 = vmatpush.msra.mxu0 %v253
        %306 = vmatpush.msra.mxu0 %v252
        %307 = vmatpush.msra.mxu0 %v251
        %308 = vmatpush.msra.mxu0 %v250
        %309 = vmatpush.msra.mxu0 %v249
        %310 = vmatmul.f32.gmra.mxu0 %v292
        %v311 = vpop.f32.mrf.mxu0
        %v312 = vadd.f32 0.0, %v311
        %313 = vdwg.mxu0
        %v314 = vmul.f32 %v312, 0.03125
        %316 = vset.pattern.permute.xlu0 0
        %317 = vperm.xlu0 %316, %v314
        %v318 = vpop.permute.xlu0 %317
        %v320 = vsub.f32 %v292, %v318
        %v321 = vmul.f32 %v320, %v320
        %322 = vmatpush.msra.mxu0 %v264
        %323 = vmatpush.msra.mxu0 %v263
        %324 = vmatpush.msra.mxu0 %v262
        %325 = vmatpush.msra.mxu0 %v261
        %326 = vmatpush.msra.mxu0 %v260
        %327 = vmatpush.msra.mxu0 %v259
        %328 = vmatpush.msra.mxu0 %v258
        %329 = vmatpush.msra.mxu0 %v257
        %330 = vmatpush.msra.mxu0 %v256
        %331 = vmatpush.msra.mxu0 %v255
        %332 = vmatpush.msra.mxu0 %v254
        %333 = vmatpush.msra.mxu0 %v253
        %334 = vmatpush.msra.mxu0 %v252
        %335 = vmatpush.msra.mxu0 %v251
        %336 = vmatpush.msra.mxu0 %v250
        %337 = vmatpush.msra.mxu0 %v249
        %338 = vmatmul.f32.gmra.mxu0 %v321
        %v339 = vpop.f32.mrf.mxu0
        %v340 = vadd.f32 0.0, %v339
        %341 = vdwg.mxu0
        %v342 = vmul.f32 %v340, 0.03125
        %v343 = vadd.f32 %v342, 1e-05
        %v344 = vrsqrt.pop %v343
        %v345 = vmul.f32 %v344, %v343
        %v346 = vmul.f32 %v345, %v344
        %v347 = vmul.f32 0.5, %v346
        %v348 = vsub.f32 1.5, %v347
        %v349 = vmul.f32 %v344, %v348
        %vm350 = vweird.f32 %v343
        %vm351 = vweird.f32 %v344
        %vm352 = vmor %vm350, %vm351
        %v353 = vsel %vm352, %v344, %v349
        %355 = vset.pattern.permute.xlu0 0
        %356 = vperm.xlu0 %355, %v353
        %v357 = vpop.permute.xlu0 %356
        %v359 = vmul.f32 %v320, %v357
        %v360 = vperm.slane %v196, 0
        %v361 = vmul.f32 %v359, %v360
        %v362 = vperm.slane %v197, 0
        %v363 = vadd.f32 %v361, %v362
        %v364 = vld [vmem:[%s3] sm:$0xff]
        %v365 = vadd.f32 %v363, %v364
        %366 = vmatpush.msra.mxu0 %v264
        %367 = vmatpush.msra.mxu0 %v263
        %368 = vmatpush.msra.mxu0 %v262
        %369 = vmatpush.msra.mxu0 %v261
        %370 = vmatpush.msra.mxu0 %v260
        %371 = vmatpush.msra.mxu0 %v259
        %372 = vmatpush.msra.mxu0 %v258
        %373 = vmatpush.msra.mxu0 %v257
        %374 = vmatpush.msra.mxu0 %v256
        %375 = vmatpush.msra.mxu0 %v255
        %376 = vmatpush.msra.mxu0 %v254
        %377 = vmatpush.msra.mxu0 %v253
        %378 = vmatpush.msra.mxu0 %v252
        %379 = vmatpush.msra.mxu0 %v251
        %380 = vmatpush.msra.mxu0 %v250
        %381 = vmatpush.msra.mxu0 %v249
        %382 = vmatmul.f32.gmra.mxu0 %v365
        %v383 = vpop.f32.mrf.mxu0
        %v384 = vadd.f32 0.0, %v383
        %385 = vdwg.mxu0
        %v386 = vmul.f32 %v384, 0.03125
        %388 = vset.pattern.permute.xlu0 0
        %389 = vperm.xlu0 %388, %v386
        %v390 = vpop.permute.xlu0 %389
        %v392 = vsub.f32 %v365, %v390
        %v393 = vmul.f32 %v392, %v392
        %394 = vmatpush.msra.mxu0 %v264
        %395 = vmatpush.msra.mxu0 %v263
        %396 = vmatpush.msra.mxu0 %v262
        %397 = vmatpush.msra.mxu0 %v261
        %398 = vmatpush.msra.mxu0 %v260
        %399 = vmatpush.msra.mxu0 %v259
        %400 = vmatpush.msra.mxu0 %v258
        %401 = vmatpush.msra.mxu0 %v257
        %402 = vmatpush.msra.mxu0 %v256
        %403 = vmatpush.msra.mxu0 %v255
        %404 = vmatpush.msra.mxu0 %v254
        %405 = vmatpush.msra.mxu0 %v253
        %406 = vmatpush.msra.mxu0 %v252
        %407 = vmatpush.msra.mxu0 %v251
        %408 = vmatpush.msra.mxu0 %v250
        %409 = vmatpush.msra.mxu0 %v249
        %410 = vmatmul.f32.gmra.mxu0 %v393
        %v411 = vpop.f32.mrf.mxu0
        %v412 = vadd.f32 0.0, %v411
        %413 = vdwg.mxu0
        %v414 = vmul.f32 %v412, 0.03125
        %v415 = vadd.f32 %v414, 1e-05
        %v416 = vrsqrt.pop %v415
        %v417 = vmul.f32 %v416, %v415
        %v418 = vmul.f32 %v417, %v416
        %v419 = vmul.f32 0.5, %v418
        %v420 = vsub.f32 1.5, %v419
        %v421 = vmul.f32 %v416, %v420
        %vm422 = vweird.f32 %v415
        %vm423 = vweird.f32 %v416
        %vm424 = vmor %vm422, %vm423
        %v425 = vsel %vm424, %v416, %v421
        %427 = vset.pattern.permute.xlu0 0
        %428 = vperm.xlu0 %427, %v425
        %v429 = vpop.permute.xlu0 %428
        %v431 = vmul.f32 %v392, %v429
        %v432 = vperm.slane %v198, 0
        %v433 = vmul.f32 %v431, %v432
        %v434 = vperm.slane %v199, 0
        %v435 = vadd.f32 %v433, %v434
        %436 = vst [vmem:[%s188] sm:$0xff] %v435
        %s437 = sand.u32 %s115, 1
        %s438 = scalar_lea.sflag [#allocation3], %s437
        %s439 = sand.u32 %s115, 1
        %s440 = smul.addr %s439, 8
        %s441 = scalar_lea.vmem [#allocation2], %s440
        // Predicated region
        $region37: #{tpu_custom_call.1} parent=35 // pred_check
          %p442 = pneg %p125
        $region38: #{tpu_custom_call.1} parent=35 // pred_check_branch
          %444 = sbr.rel (%p442) target = $region40
        $region39: #{tpu_custom_call.1} parent=35 // pred_region
          %446 = vsyncadd %s438, 0
          %s447 = smul.addr %s18, 8
          %s448 = scalar_lea.hbm %s4, %s447
          %s450 = sshll.u32 %s441, 4
          %s451 = int_to_ptr.vmem [resolvable:$true] %s450
          %s452 = sshll.u32 %s448, 4
          %s453 = int_to_ptr.hbm [resolvable:$true] %s452
          %455 = dma.vmem_to_hbm [thread:$0]  %s451, 128, %s453, %s438
        $region40: #{tpu_custom_call.1} parent=35 // pred_fallthru
          _
      $region36: #{tpu_custom_call.1} parent=5 // pred_fallthru
        _
      %p456 = scmp.le.s32.totalorder 2, %s13
      // Predicated region
      $region41: #{tpu_custom_call.1} parent=5 // pred_check
        %p457 = pneg %p456
      $region42: #{tpu_custom_call.1} parent=5 // pred_check_branch
        %459 = sbr.rel (%p457) target = $region44
      $region43: #{tpu_custom_call.1} parent=5 // pred_region
        %s460 = ssub.s32 %s13, 2
        // Predicated region
        $region45: #{tpu_custom_call.1} parent=43 // pred_check
          %p461 = pneg %p131
        $region46: #{tpu_custom_call.1} parent=43 // pred_check_branch
          %463 = sbr.rel (%p461) target = $region48
        $region47: #{tpu_custom_call.1} parent=43 // pred_region
          %s464 = sand.u32 %s116, 1
          %s465 = scalar_lea.sflag [#allocation3], %s464
          %s466 = sand.u32 %s116, 1
          %s467 = smul.addr %s466, 8
          %s468 = scalar_lea.vmem [#allocation2], %s467
          %470 = dma.done %s465, 128
        $region48: #{tpu_custom_call.1} parent=43 // pred_fallthru
          _
      $region44: #{tpu_custom_call.1} parent=5 // pred_fallthru
        _
    $region6: #{tpu_custom_call.1} parent=1 // loop_footer
      %s17 = sadd.s32 1, %s13
    $region7: #{tpu_custom_call.1} parent=1 // loop_footer_branch
      %12 = sbr.rel target = $region3
    $region8: #{tpu_custom_call.1} parent=1 // loop_exit
      _
    %471 = vsyncpa [#allocation3], 1
    %s472 = scalar_lea.sflag [#allocation3], 1
    %473 = vsyncpa %s472, 1

</llo_original>
